<compile_context>
chip_gen: v6e
topology: v6e:2x2x1
jax: 0.10.0
libtpu: 0.0.40
codegen_flags: <defaults>
</compile_context>

<pallas_src>
import functools

import jax
import jax.numpy as jnp
from jax import lax
from jax.experimental import pallas as pl
from jax.experimental.pallas import tpu as pltpu


def _round_up(x: int, m: int) -> int:
    return (x + m - 1) // m * m


def _vmem_budget_bytes() -> int:
    """Per-core VMEM capacity, queried at trace time; conservative fallback."""
    try:
        return int(pltpu.get_tpu_info().vmem_capacity_bytes)
    except Exception:
        return 64 << 20  # v7x per-TensorCore VMEM is the smallest generation


def prepare_daph_H(H: jax.Array) -> jax.Array:
    """One-time (beforeRun) storage-side preparation of the H buffer.

    Casts to f32 and lane-pads the hash dimension to a multiple of 128 so the
    per-call kernel only ever moves dense rows.  Done once, never per forward.
    """
    n, bits = H.shape
    bits_p = _round_up(bits, 128)
    Hp = jnp.zeros((n, bits_p), jnp.float32)
    return Hp.at[:, :bits].set(H.astype(jnp.float32))


# --------------------------------------------------------------------------
# Fast path: H fully resident in VMEM, rows gathered with in-kernel loads.
# --------------------------------------------------------------------------
def _daph_resident_kernel(idx_ref, b_ref, h_ref, out_ref, gat_ref, acc_ref, *,
                          tm, batch, inv_denom):
    i = pl.program_id(0)
    bits_p = acc_ref.shape[-1]

    @pl.when(i == 0)
    def _init():
        acc_ref[...] = jnp.zeros_like(acc_ref)

    base = i * tm
    # Gather tm rows of H (VMEM-resident) using dynamic-sublane row loads.
    for j in range(tm):
        r = idx_ref[base + j]
        gat_ref[pl.ds(j, 1), :] = h_ref[pl.ds(r, 1), :]

    row = base + lax.broadcasted_iota(jnp.int32, (tm, bits_p), 0)
    d = b_ref[...] - gat_ref[...]
    d = jnp.where(row < batch, d, 0.0)          # mask padded batch rows
    acc_ref[...] += d * d

    @pl.when(i == pl.num_programs(0) - 1)
    def _fin():
        out_ref[0, 0] = jnp.sum(acc_ref[...]) * jnp.float32(inv_denom)


# --------------------------------------------------------------------------
# Streaming path: H stays in HBM; tm gathered rows per step via manual DMA
# into a double buffer (prefetch step i+1 while computing step i).
# --------------------------------------------------------------------------
def _daph_stream_kernel(idx_ref, b_ref, h_hbm, out_ref, hbuf, sem, acc_ref, *,
                        tm, batch, inv_denom):
    i = pl.program_id(0)
    nsteps = pl.num_programs(0)
    bits_p = acc_ref.shape[-1]

    def fetch(step, slot):
        base = step * tm
        for j in range(tm):
            r = idx_ref[base + j]
            pltpu.make_async_copy(h_hbm.at[r], hbuf.at[slot, j],
                                  sem.at[slot]).start()

    def wait_tile(slot):
        # One shared DMA semaphore per slot: each wait consumes one row copy;
        # after tm waits all tm row DMAs of this tile have landed.
        for _ in range(tm):
            pltpu.make_async_copy(h_hbm.at[0], hbuf.at[slot, 0],
                                  sem.at[slot]).wait()

    @pl.when(i == 0)
    def _init():
        acc_ref[...] = jnp.zeros_like(acc_ref)
        fetch(0, 0)                               # prime the double buffer

    slot = i % 2

    @pl.when(i + 1 < nsteps)
    def _prefetch():
        fetch(i + 1, 1 - slot)                    # keep next tile's DMAs in flight

    wait_tile(slot)

    row = i * tm + lax.broadcasted_iota(jnp.int32, (tm, bits_p), 0)
    d = b_ref[...] - hbuf[slot]
    d = jnp.where(row < batch, d, 0.0)            # mask padded batch rows
    acc_ref[...] += d * d

    @pl.when(i == nsteps - 1)
    def _fin():
        out_ref[0, 0] = jnp.sum(acc_ref[...]) * jnp.float32(inv_denom)


def daph_forward(b, H_prepared, idx, bits, *, force_streaming=False):
    """Pallas equivalent of DAPH.forward: mean((b - H[idx])**2) -> scalar f32.

    H_prepared must come from prepare_daph_H (f32, lane-padded to 128).
    NOTE: idx is clamped into range (Pallas does not bounds-check gathers);
    PyTorch would raise on out-of-range indices instead.
    """
    batch = int(b.shape[0])
    n_train, bits_p = int(H_prepared.shape[0]), int(H_prepared.shape[1])
    assert int(b.shape[1]) == bits and bits <= bits_p

    budget = _vmem_budget_bytes()
    h_bytes = n_train * bits_p * 4
    resident = (not force_streaming) and (h_bytes <= budget // 4)

    # Batch rows per grid step: dense (8k, 128m) tiles, amortizing step cost.
    tm = min(128 if resident else 32, _round_up(batch, 8))
    batch_p = _round_up(batch, tm)
    grid = batch_p // tm

    # Per-call prep touches only the small operands (b, idx); H is untouched.
    b_p = jnp.zeros((batch_p, bits_p), jnp.float32).at[:batch, :bits].set(
        b.astype(jnp.float32))
    idx_p = jnp.zeros((batch_p,), jnp.int32).at[:batch].set(
        jnp.clip(idx.astype(jnp.int32), 0, n_train - 1))

    inv_denom = 1.0 / float(batch * bits)
    b_spec = pl.BlockSpec((tm, bits_p), lambda i, idx_ref: (i, 0))
    out_spec = pl.BlockSpec(memory_space=pltpu.SMEM)

    if resident:
        kernel = functools.partial(_daph_resident_kernel, tm=tm, batch=batch,
                                   inv_denom=inv_denom)
        grid_spec = pltpu.PrefetchScalarGridSpec(
            num_scalar_prefetch=1, grid=(grid,),
            in_specs=[b_spec,
                      # full H resident in VMEM across the whole grid
                      pl.BlockSpec((n_train, bits_p), lambda i, idx_ref: (0, 0))],
            out_specs=out_spec,
            scratch_shapes=[pltpu.VMEM((tm, bits_p), jnp.float32),   # gathered rows
                            pltpu.VMEM((tm, bits_p), jnp.float32)])  # SSE accumulator
        vmem_limit = int(min(budget, 2 * h_bytes + (8 << 20)))
    else:
        kernel = functools.partial(_daph_stream_kernel, tm=tm, batch=batch,
                                   inv_denom=inv_denom)
        grid_spec = pltpu.PrefetchScalarGridSpec(
            num_scalar_prefetch=1, grid=(grid,),
            in_specs=[b_spec,
                      pl.BlockSpec(memory_space=pl.ANY)],            # H stays in HBM
            out_specs=out_spec,
            scratch_shapes=[pltpu.VMEM((2, tm, bits_p), jnp.float32),  # row double buffer
                            pltpu.SemaphoreType.DMA((2,)),             # one sem per slot
                            pltpu.VMEM((tm, bits_p), jnp.float32)])    # SSE accumulator
        vmem_limit = int(min(budget, 32 << 20))

    out = pl.pallas_call(
        kernel,
        grid_spec=grid_spec,
        out_shape=jax.ShapeDtypeStruct((1, 1), jnp.float32),
        compiler_params=pltpu.CompilerParams(
            # SSE accumulator (and DMA priming) carried across the batch axis.
            dimension_semantics=("arbitrary",),
            vmem_limit_bytes=vmem_limit),
    )(idx_p, b_p, H_prepared)
    return out[0, 0]


if __name__ == "__main__":
    # Small, deterministic shapes consistent with the module:
    #   bits (hash length) = 64, training-set size = 64, batch = 8.
    BITS, N_TRAIN, BATCH = 64, 64, 8

    key = jax.random.PRNGKey(0)
    k_b, k_h, k_idx = jax.random.split(key, 3)

    # Continuous codes from the network head (roughly in [-1, 1]).
    b = jnp.tanh(jax.random.normal(k_b, (BATCH, BITS), dtype=jnp.float32))
    # H buffer: torch.randn(...).sign() -> +-1 matrix (deterministic here).
    H = jnp.sign(jax.random.normal(k_h, (N_TRAIN, BITS), dtype=jnp.float32))
    H = jnp.where(H == 0, 1.0, H).astype(jnp.float32)
    idx = jax.random.randint(k_idx, (BATCH,), 0, N_TRAIN, dtype=jnp.int32)

    Hp = prepare_daph_H(H)          # one-time beforeRun()-style storage prep

    # Pure-JAX reference of the forward pass.
    ref = jnp.mean((b - H[idx]) ** 2)

    # Resident-H fast path (taken automatically: padded H is only 32 KiB).
    loss = jax.block_until_ready(daph_forward(b, Hp, idx, BITS))
    assert jnp.allclose(loss, ref, rtol=1e-5, atol=1e-5), (loss, ref)

    # Streaming manual-DMA gather path (what a large H would use), same data.
    loss_s = jax.block_until_ready(
        daph_forward(b, Hp, idx, BITS, force_streaming=True))
    assert jnp.allclose(loss_s, ref, rtol=1e-5, atol=1e-5), (loss_s, ref)

    # Ragged batch exercises the padded-row masking.
    b5, idx5 = b[:5], idx[:5]
    ref5 = jnp.mean((b5 - H[idx5]) ** 2)
    loss5 = jax.block_until_ready(daph_forward(b5, Hp, idx5, BITS))
    assert jnp.allclose(loss5, ref5, rtol=1e-5, atol=1e-5), (loss5, ref5)

    # TODO(synk): beforeRun/epochStart/stepStart hooks, buffer registration and
    # calcLoss() are trainer-side state management, not part of forward().
    print("KERNEL_OK")
</pallas_src>

<mosaic_0001>
module attributes {stable_mosaic.version = 11 : i64} {
  func.func @_daph_resident_kernel(%arg0: i32, %arg1: memref<8xi32, #tpu.memory_space<smem>>, %arg2: memref<8x128xf32, #tpu.memory_space<vmem>>, %arg3: memref<64x128xf32, #tpu.memory_space<vmem>>, %arg4: memref<1x1xf32, #tpu.memory_space<smem>>, %arg5: memref<8x128xf32, #tpu.memory_space<vmem>>, %arg6: memref<8x128xf32, #tpu.memory_space<vmem>>) attributes {dimension_semantics = [#tpu.dimension_semantics<arbitrary>], iteration_bounds = array<i64: 1>, scalar_prefetch = 1 : i64, scratch_operands = 2 : i64, tpu.core_type = #tpu.core_type<tc>, window_params = [{transform_indices = @transform_0, window_bounds = array<i64: 8, 128>}, {pipeline_mode = #tpu.pipeline_mode<synchronous>, transform_indices = @transform_1, window_bounds = array<i64: 64, 128>}, {transform_indices = @transform_2, window_bounds = array<i64: 1, 1>}]} {
    %c0_i32 = arith.constant 0 : i32
    %0 = arith.cmpi eq, %arg0, %c0_i32 : i32
    %1 = arith.extui %0 : i1 to i32
    %c0_i32_0 = arith.constant 0 : i32
    %2 = arith.cmpi ne, %1, %c0_i32_0 : i32
    scf.if %2 {
      %cst_29 = arith.constant 0.000000e+00 : f32
      %69 = vector.broadcast %cst_29 : f32 to vector<8x128xf32>
      %c0_30 = arith.constant 0 : index
      %c0_31 = arith.constant 0 : index
      %70 = vector.load %arg6[%c0_30, %c0_31] : memref<8x128xf32, #tpu.memory_space<vmem>>, vector<8x128xf32>
      tpu.vector_store %arg6[%c0_30, %c0_31], %69 {strides = array<i32>} : memref<8x128xf32, #tpu.memory_space<vmem>>, vector<8x128xf32>,
    } else {
    }
    %c8_i32 = arith.constant 8 : i32
    %3 = arith.muli %arg0, %c8_i32 : i32
    %c0_i32_1 = arith.constant 0 : i32
    %4 = arith.addi %3, %c0_i32_1 : i32
    %5 = arith.index_cast %4 : i32 to index
    %6 = memref.load %arg1[%5] : memref<8xi32, #tpu.memory_space<smem>>
    %7 = arith.index_cast %6 : i32 to index
    %c0 = arith.constant 0 : index
    %8 = vector.load %arg3[%7, %c0] : memref<64x128xf32, #tpu.memory_space<vmem>>, vector<1x128xf32>
    %c0_2 = arith.constant 0 : index
    %c0_3 = arith.constant 0 : index
    %9 = vector.load %arg5[%c0_2, %c0_3] : memref<8x128xf32, #tpu.memory_space<vmem>>, vector<1x128xf32>
    tpu.vector_store %arg5[%c0_2, %c0_3], %8 {strides = array<i32>} : memref<8x128xf32, #tpu.memory_space<vmem>>, vector<1x128xf32>,
    %c1_i32 = arith.constant 1 : i32
    %10 = arith.addi %3, %c1_i32 : i32
    %11 = arith.index_cast %10 : i32 to index
    %12 = memref.load %arg1[%11] : memref<8xi32, #tpu.memory_space<smem>>
    %13 = arith.index_cast %12 : i32 to index
    %c0_4 = arith.constant 0 : index
    %14 = vector.load %arg3[%13, %c0_4] : memref<64x128xf32, #tpu.memory_space<vmem>>, vector<1x128xf32>
    %c1 = arith.constant 1 : index
    %c0_5 = arith.constant 0 : index
    %15 = vector.load %arg5[%c1, %c0_5] : memref<8x128xf32, #tpu.memory_space<vmem>>, vector<1x128xf32>
    tpu.vector_store %arg5[%c1, %c0_5], %14 {strides = array<i32>} : memref<8x128xf32, #tpu.memory_space<vmem>>, vector<1x128xf32>,
    %c2_i32 = arith.constant 2 : i32
    %16 = arith.addi %3, %c2_i32 : i32
    %17 = arith.index_cast %16 : i32 to index
    %18 = memref.load %arg1[%17] : memref<8xi32, #tpu.memory_space<smem>>
    %19 = arith.index_cast %18 : i32 to index
    %c0_6 = arith.constant 0 : index
    %20 = vector.load %arg3[%19, %c0_6] : memref<64x128xf32, #tpu.memory_space<vmem>>, vector<1x128xf32>
    %c2 = arith.constant 2 : index
    %c0_7 = arith.constant 0 : index
    %21 = vector.load %arg5[%c2, %c0_7] : memref<8x128xf32, #tpu.memory_space<vmem>>, vector<1x128xf32>
    tpu.vector_store %arg5[%c2, %c0_7], %20 {strides = array<i32>} : memref<8x128xf32, #tpu.memory_space<vmem>>, vector<1x128xf32>,
    %c3_i32 = arith.constant 3 : i32
    %22 = arith.addi %3, %c3_i32 : i32
    %23 = arith.index_cast %22 : i32 to index
    %24 = memref.load %arg1[%23] : memref<8xi32, #tpu.memory_space<smem>>
    %25 = arith.index_cast %24 : i32 to index
    %c0_8 = arith.constant 0 : index
    %26 = vector.load %arg3[%25, %c0_8] : memref<64x128xf32, #tpu.memory_space<vmem>>, vector<1x128xf32>
    %c3 = arith.constant 3 : index
    %c0_9 = arith.constant 0 : index
    %27 = vector.load %arg5[%c3, %c0_9] : memref<8x128xf32, #tpu.memory_space<vmem>>, vector<1x128xf32>
    tpu.vector_store %arg5[%c3, %c0_9], %26 {strides = array<i32>} : memref<8x128xf32, #tpu.memory_space<vmem>>, vector<1x128xf32>,
    %c4_i32 = arith.constant 4 : i32
    %28 = arith.addi %3, %c4_i32 : i32
    %29 = arith.index_cast %28 : i32 to index
    %30 = memref.load %arg1[%29] : memref<8xi32, #tpu.memory_space<smem>>
    %31 = arith.index_cast %30 : i32 to index
    %c0_10 = arith.constant 0 : index
    %32 = vector.load %arg3[%31, %c0_10] : memref<64x128xf32, #tpu.memory_space<vmem>>, vector<1x128xf32>
    %c4 = arith.constant 4 : index
    %c0_11 = arith.constant 0 : index
    %33 = vector.load %arg5[%c4, %c0_11] : memref<8x128xf32, #tpu.memory_space<vmem>>, vector<1x128xf32>
    tpu.vector_store %arg5[%c4, %c0_11], %32 {strides = array<i32>} : memref<8x128xf32, #tpu.memory_space<vmem>>, vector<1x128xf32>,
    %c5_i32 = arith.constant 5 : i32
    %34 = arith.addi %3, %c5_i32 : i32
    %35 = arith.index_cast %34 : i32 to index
    %36 = memref.load %arg1[%35] : memref<8xi32, #tpu.memory_space<smem>>
    %37 = arith.index_cast %36 : i32 to index
    %c0_12 = arith.constant 0 : index
    %38 = vector.load %arg3[%37, %c0_12] : memref<64x128xf32, #tpu.memory_space<vmem>>, vector<1x128xf32>
    %c5 = arith.constant 5 : index
    %c0_13 = arith.constant 0 : index
    %39 = vector.load %arg5[%c5, %c0_13] : memref<8x128xf32, #tpu.memory_space<vmem>>, vector<1x128xf32>
    tpu.vector_store %arg5[%c5, %c0_13], %38 {strides = array<i32>} : memref<8x128xf32, #tpu.memory_space<vmem>>, vector<1x128xf32>,
    %c6_i32 = arith.constant 6 : i32
    %40 = arith.addi %3, %c6_i32 : i32
    %41 = arith.index_cast %40 : i32 to index
    %42 = memref.load %arg1[%41] : memref<8xi32, #tpu.memory_space<smem>>
    %43 = arith.index_cast %42 : i32 to index
    %c0_14 = arith.constant 0 : index
    %44 = vector.load %arg3[%43, %c0_14] : memref<64x128xf32, #tpu.memory_space<vmem>>, vector<1x128xf32>
    %c6 = arith.constant 6 : index
    %c0_15 = arith.constant 0 : index
    %45 = vector.load %arg5[%c6, %c0_15] : memref<8x128xf32, #tpu.memory_space<vmem>>, vector<1x128xf32>
    tpu.vector_store %arg5[%c6, %c0_15], %44 {strides = array<i32>} : memref<8x128xf32, #tpu.memory_space<vmem>>, vector<1x128xf32>,
    %c7_i32 = arith.constant 7 : i32
    %46 = arith.addi %3, %c7_i32 : i32
    %47 = arith.index_cast %46 : i32 to index
    %48 = memref.load %arg1[%47] : memref<8xi32, #tpu.memory_space<smem>>
    %49 = arith.index_cast %48 : i32 to index
    %c0_16 = arith.constant 0 : index
    %50 = vector.load %arg3[%49, %c0_16] : memref<64x128xf32, #tpu.memory_space<vmem>>, vector<1x128xf32>
    %c7 = arith.constant 7 : index
    %c0_17 = arith.constant 0 : index
    %51 = vector.load %arg5[%c7, %c0_17] : memref<8x128xf32, #tpu.memory_space<vmem>>, vector<1x128xf32>
    tpu.vector_store %arg5[%c7, %c0_17], %50 {strides = array<i32>} : memref<8x128xf32, #tpu.memory_space<vmem>>, vector<1x128xf32>,
    %52 = tpu.iota {dimensions = array<i32: 0>} : vector<8x128xi32>
    %53 = vector.broadcast %3 : i32 to vector<8x128xi32>
    %54 = arith.addi %53, %52 : vector<8x128xi32>
    %c0_18 = arith.constant 0 : index
    %c0_19 = arith.constant 0 : index
    %55 = vector.load %arg2[%c0_18, %c0_19] : memref<8x128xf32, #tpu.memory_space<vmem>>, vector<8x128xf32>
    %c0_20 = arith.constant 0 : index
    %c0_21 = arith.constant 0 : index
    %56 = vector.load %arg5[%c0_20, %c0_21] : memref<8x128xf32, #tpu.memory_space<vmem>>, vector<8x128xf32>
    %57 = arith.subf %55, %56 : vector<8x128xf32>
    %c8_i32_22 = arith.constant 8 : i32
    %58 = vector.broadcast %c8_i32_22 : i32 to vector<8x128xi32>
    %59 = arith.cmpi slt, %54, %58 : vector<8x128xi32>
    %cst = arith.constant 0.000000e+00 : f32
    %60 = vector.broadcast %cst : f32 to vector<8x128xf32>
    %61 = arith.select %59, %57, %60 : vector<8x128xi1>, vector<8x128xf32>
    %c0_23 = arith.constant 0 : index
    %c0_24 = arith.constant 0 : index
    %62 = vector.load %arg6[%c0_23, %c0_24] : memref<8x128xf32, #tpu.memory_space<vmem>>, vector<8x128xf32>
    %63 = arith.mulf %61, %61 : vector<8x128xf32>
    %64 = arith.addf %62, %63 : vector<8x128xf32>
    %c0_25 = arith.constant 0 : index
    %c0_26 = arith.constant 0 : index
    %65 = vector.load %arg6[%c0_25, %c0_26] : memref<8x128xf32, #tpu.memory_space<vmem>>, vector<8x128xf32>
    tpu.vector_store %arg6[%c0_25, %c0_26], %64 {strides = array<i32>} : memref<8x128xf32, #tpu.memory_space<vmem>>, vector<8x128xf32>,
    %c0_i32_27 = arith.constant 0 : i32
    %66 = arith.cmpi eq, %arg0, %c0_i32_27 : i32
    %67 = arith.extui %66 : i1 to i32
    %c0_i32_28 = arith.constant 0 : i32
    %68 = arith.cmpi ne, %67, %c0_i32_28 : i32
    scf.if %68 {
      %c0_29 = arith.constant 0 : index
      %c0_30 = arith.constant 0 : index
      %69 = vector.load %arg6[%c0_29, %c0_30] : memref<8x128xf32, #tpu.memory_space<vmem>>, vector<8x128xf32>
      %70 = vector.shape_cast %69 : vector<8x128xf32> to vector<1x8x128xf32>
      %cst_31 = arith.constant dense<0.000000e+00> : vector<1xf32>
      %71 = vector.multi_reduction <add>, %70, %cst_31 [1, 2] : vector<1x8x128xf32> to vector<1xf32>
      %72 = vector.shape_cast %71 : vector<1xf32> to vector<1x1x1xf32>
      %73 = vector.extract %72[0, 0, 0] : f32 from vector<1x1x1xf32>
      %cst_32 = arith.constant 0.001953125 : f32
      %74 = arith.mulf %73, %cst_32 : f32
      %c0_33 = arith.constant 0 : index
      %c0_34 = arith.constant 0 : index
      %75 = memref.load %arg4[%c0_33, %c0_34] : memref<1x1xf32, #tpu.memory_space<smem>>
      memref.store %74, %arg4[%c0_33, %c0_34] : memref<1x1xf32, #tpu.memory_space<smem>>
    } else {
    }
    return
  }
  func.func @transform_0(%arg0: i32, %arg1: memref<8xi32, #tpu.memory_space<smem>>) -> (i32, i32) {
    %c0_i32 = arith.constant 0 : i32
    %c0_i32_0 = arith.constant 0 : i32
    return %arg0, %c0_i32 : i32, i32
  }
  func.func @transform_1(%arg0: i32, %arg1: memref<8xi32, #tpu.memory_space<smem>>) -> (i32, i32) {
    %c0_i32 = arith.constant 0 : i32
    %c0_i32_0 = arith.constant 0 : i32
    %c0_i32_1 = arith.constant 0 : i32
    return %c0_i32, %c0_i32_0 : i32, i32
  }
  func.func @transform_2(%arg0: i32, %arg1: memref<8xi32, #tpu.memory_space<smem>>) -> (i32, i32) {
    %c0_i32 = arith.constant 0 : i32
    %c0_i32_0 = arith.constant 0 : i32
    %c0_i32_1 = arith.constant 0 : i32
    return %c0_i32, %c0_i32_0 : i32, i32
  }
}

</mosaic_0001>

<llo_original>
// kernel: tpu_custom_call.1
$region0: #{tpu_custom_call.1}
  #allocation0 [shape = 'u32[]', space=smem, size = 0x4, offset = 0x4, fixed_abs, tag = 'smem constant byte address 0x4 - core index']
  #allocation1 [shape = 'u32[144,128]{1,0:T(1,128)}', space=vmem, size = 0x12000, scoped, tag = 'internal scratch']
  #allocation2 [shape = 'f32[8,128]{1,0:T(8,128)}', space=vmem, size = 0x1000, scoped, tag = 'scratch operand']
  #allocation3 [shape = 'f32[8,128]{1,0:T(8,128)}', space=vmem, size = 0x1000, scoped, tag = 'scratch operand']
  #allocation4 [shape = 's32[1]{0}', space=sflag, size = 0x4, scoped, tag = 'scoped memory for tpu_custom_call.1']
  #allocation5 [shape = 'u8[512]{0}', space=smem, size = 0x200, scoped, tag = 'prefetched SMEM operand 0']
  %s0 = inlined_call_operand.hbm [shape: s32[8], index: 0, kind: input, shape index: {}]
  %s1 = inlined_call_operand.hbm [shape: f32[8,128], index: 1, kind: input, shape index: {}]
  %s2 = inlined_call_operand.hbm [shape: f32[64,128], index: 2, kind: input, shape index: {}]
  %s3 = inlined_call_operand.hbm [shape: f32[1,1], index: 3, kind: output, shape index: {}]
  %s4 = sld [smem:[#allocation0]]
  $region34: #{tpu_custom_call.1} parent=0
    _
  %s6 = ssub.s32 1, %s4
  %s7 = scalar_select 0, %s6, %s4
  %9 = dma.hbm_to_smem %s0, 16, [#allocation5], [#allocation4]
  %10 = dma.done [#allocation4], 16
  %11 = sfence
  $region1: #{tpu_custom_call.1} parent=0
    #allocation6 [shape = 'u8[4096]{0}', space=vmem, size = 0x1000, scoped, tag = 'input window, operand 1, single buffered']
    #allocation7 [shape = 's32[1]{0}', space=sflag, size = 0x4, scoped, tag = 'scoped memory for tpu_custom_call.1']
    #allocation8 [shape = 's32[1]{0}', space=sflag, size = 0x4, scoped, tag = 'scoped memory for tpu_custom_call.1']
    #allocation9 [shape = 'u8[32768]{0}', space=vmem, size = 0x8000, scoped, tag = 'input window, operand 2, single buffered']
    #allocation10 [shape = 's32[1]{0}', space=sflag, size = 0x4, scoped, tag = 'scoped memory for tpu_custom_call.1']
    #allocation11 [shape = 'u8[512]{0}', space=smem, size = 0x200, scoped, tag = 'output window, operand 0, single buffered']
    %12 = vsyncpa [#allocation7], 0
    %13 = vsyncpa [#allocation10], 0
    %14 = vsyncpa [#allocation8], 0
    // Predicated region
    $region2: #{tpu_custom_call.1} parent=1 // pred_check
      _
    $region3: #{tpu_custom_call.1} parent=1 // pred_check_branch
      %16 = sbr.rel (0) target = $region5
    $region4: #{tpu_custom_call.1} parent=1 // pred_region
      %s18 = ssub.s32 128, 128
      %19 = vsyncadd [#allocation7], %s18
      %s21 = sshll.u32 [#allocation6], 4
      %s22 = int_to_ptr.vmem [resolvable:$true] %s21
      %24 = dma.hbm_to_vmem [thread:$0]  %s1, 128, %s22, [#allocation7]
    $region5: #{tpu_custom_call.1} parent=1 // pred_fallthru
      _
    // Predicated region
    $region6: #{tpu_custom_call.1} parent=1 // pred_check
      _
    $region7: #{tpu_custom_call.1} parent=1 // pred_check_branch
      %26 = sbr.rel (0) target = $region9
    $region8: #{tpu_custom_call.1} parent=1 // pred_region
      %s28 = ssub.s32 1024, 1024
      %29 = vsyncadd [#allocation10], %s28
      %s30 = sshll.u32 [#allocation9], 4
      %s31 = int_to_ptr.vmem [resolvable:$true] %s30
      %36 = dma.hbm_to_vmem [thread:$0]  %s2, 1024, %s31, [#allocation10], 128, 128, 8
    $region9: #{tpu_custom_call.1} parent=1 // pred_fallthru
      _
    // Predicated region
    $region10: #{tpu_custom_call.1} parent=1 // pred_check
      _
    $region11: #{tpu_custom_call.1} parent=1 // pred_check_branch
      %38 = sbr.rel (0) target = $region13
    $region12: #{tpu_custom_call.1} parent=1 // pred_region
      %39 = dma.done [#allocation7], 128
    $region13: #{tpu_custom_call.1} parent=1 // pred_fallthru
      _
    // Predicated region
    $region14: #{tpu_custom_call.1} parent=1 // pred_check
      _
    $region15: #{tpu_custom_call.1} parent=1 // pred_check_branch
      %41 = sbr.rel (0) target = $region17
    $region16: #{tpu_custom_call.1} parent=1 // pred_region
      %42 = dma.done [#allocation10], 1024
    $region17: #{tpu_custom_call.1} parent=1 // pred_fallthru
      _
    %p43 = scmp.eq.s32.totalorder 0, 0
    // Predicated region
    $region18: #{tpu_custom_call.1} parent=1 // pred_check
      %p44 = pneg %p43
    $region19: #{tpu_custom_call.1} parent=1 // pred_check_branch
      %46 = sbr.rel (%p44) target = $region21
    $region20: #{tpu_custom_call.1} parent=1 // pred_region
      %47 = vst [vmem:[#allocation3] sm:$0xff] 0.0
    $region21: #{tpu_custom_call.1} parent=1 // pred_fallthru
      _
    %s48 = smul.u32 0, 8
    %s49 = sld [smem:[#allocation5 + %s48]]
    %s50 = scalar_lea.vmem [#allocation9], %s49
    %v51 = vld [vmem:[%s50] sm:$0x1]
    %52 = vst [vmem:[#allocation2] sm:$0x1] %v51
    %s53 = sadd.s32 %s48, 1
    %s54 = sld [smem:[#allocation5 + %s53]]
    %s55 = scalar_lea.vmem [#allocation9], %s54
    %v56 = vld [vmem:[%s55] sm:$0x1]
    %57 = vst [vmem:[#allocation2 + $0x1] sm:$0x1] %v56
    %s58 = sadd.s32 %s48, 2
    %s59 = sld [smem:[#allocation5 + %s58]]
    %s60 = scalar_lea.vmem [#allocation9], %s59
    %v61 = vld [vmem:[%s60] sm:$0x1]
    %62 = vst [vmem:[#allocation2 + $0x2] sm:$0x1] %v61
    %s63 = sadd.s32 %s48, 3
    %s64 = sld [smem:[#allocation5 + %s63]]
    %s65 = scalar_lea.vmem [#allocation9], %s64
    %v66 = vld [vmem:[%s65] sm:$0x1]
    %67 = vst [vmem:[#allocation2 + $0x3] sm:$0x1] %v66
    %s68 = sadd.s32 %s48, 4
    %s69 = sld [smem:[#allocation5 + %s68]]
    %s70 = scalar_lea.vmem [#allocation9], %s69
    %v71 = vld [vmem:[%s70] sm:$0x1]
    %72 = vst [vmem:[#allocation2 + $0x4] sm:$0x1] %v71
    %s73 = sadd.s32 %s48, 5
    %s74 = sld [smem:[#allocation5 + %s73]]
    %s75 = scalar_lea.vmem [#allocation9], %s74
    %v76 = vld [vmem:[%s75] sm:$0x1]
    %77 = vst [vmem:[#allocation2 + $0x5] sm:$0x1] %v76
    %s78 = sadd.s32 %s48, 6
    %s79 = sld [smem:[#allocation5 + %s78]]
    %s80 = scalar_lea.vmem [#allocation9], %s79
    %v81 = vld [vmem:[%s80] sm:$0x1]
    %82 = vst [vmem:[#allocation2 + $0x6] sm:$0x1] %v81
    %s83 = sadd.s32 %s48, 7
    %s84 = sld [smem:[#allocation5 + %s83]]
    %s85 = scalar_lea.vmem [#allocation9], %s84
    %v86 = vld [vmem:[%s85] sm:$0x1]
    %87 = vst [vmem:[#allocation2 + $0x7] sm:$0x1] %v86
    %v88 = vlaneseq
    %v89 = vshrl.u32 %v88, 7
    %v90 = vstv %s48
    %v91 = vadd.s32 %v90, %v89
    %v92 = vld [vmem:[#allocation6] sm:$0xff]
    %v93 = vld [vmem:[#allocation2] sm:$0xff]
    %v94 = vsub.f32 %v92, %v93
    %vm95 = vcmp.lt.s32.totalorder %v91, 8
    %v96 = vsel %vm95, %v94, 0.0
    %v97 = vld [vmem:[#allocation3] sm:$0xff]
    %v98 = vmul.f32 %v96, %v96
    %v99 = vadd.f32 %v97, %v98
    %100 = vst [vmem:[#allocation3] sm:$0xff] %v99
    // Predicated region
    $region22: #{tpu_custom_call.1} parent=1 // pred_check
      %p101 = pneg %p43
    $region23: #{tpu_custom_call.1} parent=1 // pred_check_branch
      %103 = sbr.rel (%p101) target = $region25
    $region24: #{tpu_custom_call.1} parent=1 // pred_region
      %v104 = vld [vmem:[#allocation3] sm:$0xff]
      %105 = vadd.xlane.f32.xlu0 %v104
      %v106 = vpop.xlane.xlu0 %105
      %v107 = vrot.slane %v106, 4
      %v108 = vadd.f32 %v106, %v107
      %v109 = vrot.slane %v108, 2
      %v110 = vadd.f32 %v108, %v109
      %v111 = vrot.slane %v110, 1
      %v112 = vadd.f32 %v110, %v111
      %s113 = vtos %v112
      %s114 = smul.f32 %s113, 0.001953125
      %s115 = scalar_lea.smem [#allocation11], 0
      %116 = sst [smem:[%s115]] %s114
    $region25: #{tpu_custom_call.1} parent=1 // pred_fallthru
      _
    // Predicated region
    $region26: #{tpu_custom_call.1} parent=1 // pred_check
      _
    $region27: #{tpu_custom_call.1} parent=1 // pred_check_branch
      %118 = sbr.rel (0) target = $region29
    $region28: #{tpu_custom_call.1} parent=1 // pred_region
      %s120 = ssub.s32 16, 16
      %121 = vsyncadd [#allocation8], %s120
      %124 = dma.smem_to_hbm [#allocation11], 16, %s3, [#allocation8]
    $region29: #{tpu_custom_call.1} parent=1 // pred_fallthru
      _
    // Predicated region
    $region30: #{tpu_custom_call.1} parent=1 // pred_check
      _
    $region31: #{tpu_custom_call.1} parent=1 // pred_check_branch
      %126 = sbr.rel (0) target = $region33
    $region32: #{tpu_custom_call.1} parent=1 // pred_region
      %127 = dma.done [#allocation8], 16
    $region33: #{tpu_custom_call.1} parent=1 // pred_fallthru
      _
    %128 = sfence
    %129 = vsyncpa [#allocation7], 1
    %130 = vsyncpa [#allocation10], 1
    %131 = vsyncpa [#allocation8], 1

</llo_original>
